<compile_context>
chip_gen: v6e
topology: v6e:2x2x1
jax: 0.10.0
libtpu: 0.0.40
codegen_flags: <defaults>
</compile_context>

<pallas_src>
import jax
import jax.numpy as jnp
from jax.experimental import pallas as pl
from jax.experimental.pallas import tpu as pltpu

LANE = 128
SUBLANE = 8


def _round_up(n: int, m: int) -> int:
    return ((n + m - 1) // m) * m


def _make_critic_kernel(num_hidden: int):
    """Fused MLP kernel.

    Ref order: x, (w0, b0, ..., w{H-1}, b{H-1}), w_last_row, b_last, out.
      x          : (tile_b, state_dim) f32
      w_i        : (K_i, N_i_pad)      f32, VMEM-resident
      b_i        : (1, N_i_pad)        f32, VMEM-resident
      w_last_row : (1, K_last)         f32  (transposed final weight)
      b_last     : (1, 1)              f32  in SMEM (scalar)
      out        : (1, tile_b)         f32  (lane-dense transposed output row)
    """

    def kernel(*refs):
        x_ref = refs[0]
        o_ref = refs[-1]
        b_last_ref = refs[-2]
        w_last_ref = refs[-3]

        h = x_ref[...]  # f32 (tile_b, K0)
        for i in range(num_hidden):
            w = refs[1 + 2 * i][...]
            b = refs[2 + 2 * i][...]
            acc = jnp.dot(h, w, preferred_element_type=jnp.float32) + b
            h = jnp.tanh(acc)

        # Final layer, transposed: (1, K) . (tile_b, K)^T -> (1, tile_b).
        out_row = jax.lax.dot_general(
            w_last_ref[...], h,
            dimension_numbers=(((1,), (1,)), ((), ())),
            preferred_element_type=jnp.float32,
        )
        o_ref[...] = out_row + b_last_ref[0, 0]

    return kernel


def prepare_critic_params(weights, biases):
    """One-time param packing (do NOT call per forward).

    weights: list of (in_i, out_i) f32 arrays  (h @ W + b convention)
    biases:  list of (out_i,)      f32 arrays; last layer has out = 1
    """
    num_layers = len(weights)
    num_hidden = num_layers - 1
    state_dim = weights[0].shape[0]

    hidden = [weights[i].shape[1] for i in range(num_hidden)]
    hidden_pad = [_round_up(h, LANE) for h in hidden]

    hidden_w, hidden_b = [], []
    for i in range(num_hidden):
        w, b = weights[i], biases[i]
        kp = state_dim if i == 0 else hidden_pad[i - 1]
        npad = hidden_pad[i]
        wp = (
            jnp.zeros((kp, npad), jnp.float32)
            .at[: w.shape[0], : w.shape[1]]
            .set(w.astype(jnp.float32))
        )
        bp = (
            jnp.zeros((1, npad), jnp.float32)
            .at[0, : b.shape[0]]
            .set(b.astype(jnp.float32))
        )
        hidden_w.append(wp)
        hidden_b.append(bp)

    # Final layer: (K_last, 1) weight -> row (1, K_last_pad); bias -> (1, 1).
    w_last, b_last = weights[-1], biases[-1]
    k_last = hidden_pad[-1] if num_hidden > 0 else state_dim
    w_last_row = (
        jnp.zeros((1, k_last), jnp.float32)
        .at[0, : w_last.shape[0]]
        .set(w_last[:, 0].astype(jnp.float32))
    )
    b_last_11 = jnp.asarray(b_last, jnp.float32).reshape(1, 1)

    return {
        "state_dim": state_dim,
        "num_hidden": num_hidden,
        "hidden_pad": hidden_pad,
        "hidden_w": hidden_w,
        "hidden_b": hidden_b,
        "w_last_row": w_last_row,
        "b_last": b_last_11,
    }


def critic_forward(x, params, *, tile_b: int = 1024):
    """Fused Critic MLP forward.  x: (B, state_dim) f32 -> (B, 1) f32."""
    B, state_dim = x.shape
    assert state_dim == params["state_dim"]
    num_hidden = params["num_hidden"]
    hidden_pad = params["hidden_pad"]
    hidden_w, hidden_b = params["hidden_w"], params["hidden_b"]
    w_last_row, b_last = params["w_last_row"], params["b_last"]

    # Batch tiling: tile_b must be a LANE multiple (it is the out-block lane
    # dim).  Keep grid_b >= 2 when B allows so v7x can shard across its 2 TCs.
    b_lane = _round_up(B, LANE)
    tile_b = max(LANE, min(_round_up(tile_b, LANE), b_lane))
    if tile_b >= b_lane and b_lane >= 2 * LANE:
        tile_b = _round_up(-(-b_lane // 2), LANE)
    B_pad = _round_up(B, tile_b)
    grid_b = B_pad // tile_b

    # Only pad the batch dim (no-op when tile_b divides B).
    if B_pad != B:
        x = jnp.zeros((B_pad, state_dim), x.dtype).at[:B].set(x)
    x = x.astype(jnp.float32)

    # x tiled over the batch grid; params are full-array, constant-index blocks
    # (VMEM-resident across grid steps); final bias lives in SMEM as a scalar.
    in_specs = [pl.BlockSpec((tile_b, state_dim), lambda i: (i, 0))]
    operands = [x]
    for wp, bp in zip(hidden_w, hidden_b):
        in_specs.append(pl.BlockSpec(wp.shape, lambda i: (0, 0)))
        in_specs.append(pl.BlockSpec(bp.shape, lambda i: (0, 0)))
        operands.append(wp)
        operands.append(bp)
    in_specs.append(pl.BlockSpec(w_last_row.shape, lambda i: (0, 0)))
    in_specs.append(pl.BlockSpec(memory_space=pltpu.MemorySpace.SMEM))
    operands.append(w_last_row)
    operands.append(b_last)

    out_spec = pl.BlockSpec((1, tile_b), lambda i: (0, i))

    # Advisory cost estimate for XLA's scheduler.
    layer_dims = [state_dim] + hidden_pad + [1]
    flops = 2 * B_pad * sum(
        layer_dims[i] * layer_dims[i + 1] for i in range(len(layer_dims) - 1)
    )
    transcendentals = B_pad * sum(hidden_pad)
    param_bytes = (
        sum(wp.size * 4 + bp.size * 4 for wp, bp in zip(hidden_w, hidden_b))
        + w_last_row.size * 4
        + 4
    )
    bytes_accessed = x.size * 4 + param_bytes + B_pad * 4

    # VMEM budget: double-buffered x/out tiles + (double-buffered) resident
    # params + per-layer activation headroom, with ~2x margin.
    max_feat = max([state_dim] + hidden_pad)
    vmem_est = (
        2 * tile_b * state_dim * 4
        + 2 * tile_b * 4
        + 2 * param_bytes
        + 4 * tile_b * max_feat * 4
    )
    vmem_limit = int(min(48 * 1024 * 1024, max(16 * 1024 * 1024, 2 * vmem_est)))

    out_pad = pl.pallas_call(
        _make_critic_kernel(num_hidden),
        out_shape=jax.ShapeDtypeStruct((1, B_pad), jnp.float32),
        grid=(grid_b,),
        in_specs=in_specs,
        out_specs=out_spec,
        compiler_params=pltpu.CompilerParams(
            dimension_semantics=("parallel",),
            vmem_limit_bytes=vmem_limit,
        ),
        cost_estimate=pl.CostEstimate(
            flops=flops,
            transcendentals=transcendentals,
            bytes_accessed=bytes_accessed,
        ),
    )(*operands)

    # Drop batch padding; reshape the lane-dense row back to (B, 1).
    return out_pad[0, :B][:, None]


def init_critic_params(key, state_dim, emb_dim):
    """Orthogonal init (gain=1), zero biases — mirrors init_weights per Linear."""
    model_size = [state_dim] + list(emb_dim) + [1]
    weights, biases = [], []
    orth = jax.nn.initializers.orthogonal(scale=1.0)
    for i in range(len(model_size) - 1):
        key, sub = jax.random.split(key)
        fan_in, fan_out = model_size[i], model_size[i + 1]
        # PyTorch weight is (out, in); transpose to (in, out) for h @ W.
        w_pt = orth(sub, (fan_out, fan_in), jnp.float32)
        weights.append(jnp.asarray(w_pt).T)
        biases.append(jnp.zeros((fan_out,), jnp.float32))
    return weights, biases


def critic_reference(x, weights, biases):
    """Pure-JAX f32 reference of the same forward pass."""
    h = x
    n = len(weights)
    for i, (w, b) in enumerate(zip(weights, biases)):
        h = h @ w + b
        if i < n - 1:
            h = jnp.tanh(h)
    return h


if __name__ == "__main__":
    # Shapes consistent with the module: state_dim=32, emb_dim=[64, 32] -> out 1.
    # B=512 yields tile_b=256 and a 2-step batch grid (megacore-friendly).
    B = 512
    state_dim = 32
    emb_dim = [64, 32]

    key = jax.random.PRNGKey(0)
    key_x, key_p = jax.random.split(key)

    x = jax.random.normal(key_x, (B, state_dim), dtype=jnp.float32)
    weights, biases = init_critic_params(key_p, state_dim, emb_dim)

    # One-time param prep (hoisted out of the per-call hot path).
    params = prepare_critic_params(weights, biases)

    out = critic_forward(x, params, tile_b=1024)
    out = jax.block_until_ready(out)

    assert out.shape == (B, 1), out.shape

    ref = critic_reference(x, weights, biases)
    err = jnp.max(jnp.abs(out - ref))
    assert jnp.allclose(out, ref, atol=1e-2, rtol=1e-2), f"max abs err {err}"

    print("KERNEL_OK")
</pallas_src>

<mosaic_0001>
module attributes {stable_mosaic.version = 11 : i64} {
  func.func @kernel(%arg0: i32, %arg1: memref<256x32xf32, #tpu.memory_space<vmem>>, %arg2: memref<32x128xf32, #tpu.memory_space<vmem>>, %arg3: memref<1x128xf32, #tpu.memory_space<vmem>>, %arg4: memref<128x128xf32, #tpu.memory_space<vmem>>, %arg5: memref<1x128xf32, #tpu.memory_space<vmem>>, %arg6: memref<1x128xf32, #tpu.memory_space<vmem>>, %arg7: memref<1x1xf32, #tpu.memory_space<smem>>, %arg8: memref<1x256xf32, #tpu.memory_space<vmem>>) attributes {dimension_semantics = [#tpu.dimension_semantics<parallel>], iteration_bounds = array<i64: 2>, scalar_prefetch = 0 : i64, scratch_operands = 0 : i64, tpu.core_type = #tpu.core_type<tc>, window_params = [{transform_indices = @transform_0, window_bounds = array<i64: 256, 32>}, {pipeline_mode = #tpu.pipeline_mode<synchronous>, transform_indices = @transform_1, window_bounds = array<i64: 32, 128>}, {pipeline_mode = #tpu.pipeline_mode<synchronous>, transform_indices = @transform_2, window_bounds = array<i64: 1, 128>}, {pipeline_mode = #tpu.pipeline_mode<synchronous>, transform_indices = @transform_3, window_bounds = array<i64: 128, 128>}, {pipeline_mode = #tpu.pipeline_mode<synchronous>, transform_indices = @transform_4, window_bounds = array<i64: 1, 128>}, {pipeline_mode = #tpu.pipeline_mode<synchronous>, transform_indices = @transform_5, window_bounds = array<i64: 1, 128>}, {transform_indices = @transform_6, window_bounds = array<i64: 1, 1>}, {transform_indices = @transform_7, window_bounds = array<i64: 1, 256>}]} {
    %c0 = arith.constant 0 : index
    %c0_0 = arith.constant 0 : index
    %0 = vector.load %arg1[%c0, %c0_0] : memref<256x32xf32, #tpu.memory_space<vmem>>, vector<256x32xf32>
    %c0_1 = arith.constant 0 : index
    %c0_2 = arith.constant 0 : index
    %1 = vector.load %arg2[%c0_1, %c0_2] : memref<32x128xf32, #tpu.memory_space<vmem>>, vector<32x128xf32>
    %c0_3 = arith.constant 0 : index
    %c0_4 = arith.constant 0 : index
    %2 = vector.load %arg3[%c0_3, %c0_4] : memref<1x128xf32, #tpu.memory_space<vmem>>, vector<1x128xf32>
    %cst = arith.constant dense<0.000000e+00> : vector<256x128xf32>
    %3 = tpu.matmul %0, %1, %cst {dimension_numbers = #tpu.dot_dimension_numbers<[1], [0], [0], [1], [0, 0, 1, 1], [], []>} : vector<256x32xf32>, vector<32x128xf32>, vector<256x128xf32> -> vector<256x128xf32>
    %4 = vector.broadcast %2 : vector<1x128xf32> to vector<256x128xf32>
    %5 = arith.addf %3, %4 : vector<256x128xf32>
    %6 = math.tanh %5 : vector<256x128xf32>
    %c0_5 = arith.constant 0 : index
    %c0_6 = arith.constant 0 : index
    %7 = vector.load %arg4[%c0_5, %c0_6] : memref<128x128xf32, #tpu.memory_space<vmem>>, vector<128x128xf32>
    %c0_7 = arith.constant 0 : index
    %c0_8 = arith.constant 0 : index
    %8 = vector.load %arg5[%c0_7, %c0_8] : memref<1x128xf32, #tpu.memory_space<vmem>>, vector<1x128xf32>
    %cst_9 = arith.constant dense<0.000000e+00> : vector<256x128xf32>
    %9 = tpu.matmul %6, %7, %cst_9 {dimension_numbers = #tpu.dot_dimension_numbers<[1], [0], [0], [1], [0, 0, 1, 1], [], []>} : vector<256x128xf32>, vector<128x128xf32>, vector<256x128xf32> -> vector<256x128xf32>
    %10 = vector.broadcast %8 : vector<1x128xf32> to vector<256x128xf32>
    %11 = arith.addf %9, %10 : vector<256x128xf32>
    %12 = math.tanh %11 : vector<256x128xf32>
    %c0_10 = arith.constant 0 : index
    %c0_11 = arith.constant 0 : index
    %13 = vector.load %arg6[%c0_10, %c0_11] : memref<1x128xf32, #tpu.memory_space<vmem>>, vector<1x128xf32>
    %cst_12 = arith.constant dense<0.000000e+00> : vector<1x256xf32>
    %14 = tpu.matmul %13, %12, %cst_12 {dimension_numbers = #tpu.dot_dimension_numbers<[1], [1], [0], [0], [0, 0, 1, 0], [], []>} : vector<1x128xf32>, vector<256x128xf32>, vector<1x256xf32> -> vector<1x256xf32>
    %c0_13 = arith.constant 0 : index
    %c0_14 = arith.constant 0 : index
    %15 = memref.load %arg7[%c0_13, %c0_14] : memref<1x1xf32, #tpu.memory_space<smem>>
    %16 = vector.broadcast %15 : f32 to vector<1x256xf32>
    %17 = arith.addf %14, %16 : vector<1x256xf32>
    %c0_15 = arith.constant 0 : index
    %c0_16 = arith.constant 0 : index
    %18 = vector.load %arg8[%c0_15, %c0_16] : memref<1x256xf32, #tpu.memory_space<vmem>>, vector<1x256xf32>
    tpu.vector_store %arg8[%c0_15, %c0_16], %17 {strides = array<i32>} : memref<1x256xf32, #tpu.memory_space<vmem>>, vector<1x256xf32>,
    return
  }
  func.func @transform_0(%arg0: i32) -> (i32, i32) {
    %c0_i32 = arith.constant 0 : i32
    %c0_i32_0 = arith.constant 0 : i32
    return %arg0, %c0_i32 : i32, i32
  }
  func.func @transform_1(%arg0: i32) -> (i32, i32) {
    %c0_i32 = arith.constant 0 : i32
    %c0_i32_0 = arith.constant 0 : i32
    %c0_i32_1 = arith.constant 0 : i32
    return %c0_i32, %c0_i32_0 : i32, i32
  }
  func.func @transform_2(%arg0: i32) -> (i32, i32) {
    %c0_i32 = arith.constant 0 : i32
    %c0_i32_0 = arith.constant 0 : i32
    %c0_i32_1 = arith.constant 0 : i32
    return %c0_i32, %c0_i32_0 : i32, i32
  }
  func.func @transform_3(%arg0: i32) -> (i32, i32) {
    %c0_i32 = arith.constant 0 : i32
    %c0_i32_0 = arith.constant 0 : i32
    %c0_i32_1 = arith.constant 0 : i32
    return %c0_i32, %c0_i32_0 : i32, i32
  }
  func.func @transform_4(%arg0: i32) -> (i32, i32) {
    %c0_i32 = arith.constant 0 : i32
    %c0_i32_0 = arith.constant 0 : i32
    %c0_i32_1 = arith.constant 0 : i32
    return %c0_i32, %c0_i32_0 : i32, i32
  }
  func.func @transform_5(%arg0: i32) -> (i32, i32) {
    %c0_i32 = arith.constant 0 : i32
    %c0_i32_0 = arith.constant 0 : i32
    %c0_i32_1 = arith.constant 0 : i32
    return %c0_i32, %c0_i32_0 : i32, i32
  }
  func.func @transform_6(%arg0: i32) -> (i32, i32) {
    %c0_i32 = arith.constant 0 : i32
    %c0_i32_0 = arith.constant 0 : i32
    %c0_i32_1 = arith.constant 0 : i32
    return %c0_i32, %c0_i32_0 : i32, i32
  }
  func.func @transform_7(%arg0: i32) -> (i32, i32) {
    %c0_i32 = arith.constant 0 : i32
    %c0_i32_0 = arith.constant 0 : i32
    return %c0_i32, %arg0 : i32, i32
  }
}

</mosaic_0001>

<llo_original>
// kernel: tpu_custom_call.1
$region0: #{tpu_custom_call.1}
  #allocation0 [shape = 'u32[]', space=smem, size = 0x4, offset = 0x4, fixed_abs, tag = 'smem constant byte address 0x4 - core index']
  #allocation1 [shape = 'u32[144,128]{1,0:T(1,128)}', space=vmem, size = 0x12000, scoped, tag = 'internal scratch']
  #allocation2 [shape = 'f32[1,1]{1,0:T(1,128)S(6)}', space=smem, size = 0x200, scoped, tag = 'scoped memory for tpu_custom_call.1']
  %s0 = inlined_call_operand.vmem [shape: f32[512,32], index: 0, kind: input, shape index: {}]
  %s1 = inlined_call_operand.vmem [shape: f32[32,128], index: 1, kind: input, shape index: {}]
  %s2 = inlined_call_operand.vmem [shape: f32[1,128], index: 2, kind: input, shape index: {}]
  %s3 = inlined_call_operand.vmem [shape: f32[128,128], index: 3, kind: input, shape index: {}]
  %s4 = inlined_call_operand.vmem [shape: f32[1,128], index: 4, kind: input, shape index: {}]
  %s5 = inlined_call_operand.vmem [shape: f32[1,128], index: 5, kind: input, shape index: {}]
  %s6 = inlined_call_operand.<no memory space> [shape: f32[1,1], index: 6, kind: input, shape index: {}]
  %s7 = inlined_call_operand.hbm [shape: f32[1,512], index: 7, kind: output, shape index: {}]
  %s8 = sld [smem:[#allocation0]]
  $region61: #{tpu_custom_call.1} parent=0
    _
  %s10 = ssub.s32 1, %s8
  %s11 = scalar_select 0, %s10, %s8
  %12 = sst [smem:[#allocation2]] %s6
  $region1: #{tpu_custom_call.1} parent=0
    #allocation3 [shape = 'u8[2048]{0}', space=vmem, size = 0x800, scoped, tag = 'output window, operand 0']
    #allocation4 [shape = 's32[2]{0}', space=sflag, size = 0x8, scoped, tag = 'scoped memory for tpu_custom_call.1']
    %13 = vsyncpa [#allocation4], 0
    %s14 = scalar_lea.sflag [#allocation4], 1
    %15 = vsyncpa %s14, 0
    loop: start=0, step=1, limit=4
    $region2: #{tpu_custom_call.1} parent=1 // loop_pre_header
      _
    $region3: #{tpu_custom_call.1} parent=1 // loop_header
      %s17 = sphi 0, %s21
      %p18 = scmp.ge.s32.totalorder %s17, 4
      %s27 = sphi 0, %s29
      %s30 = sphi 0, %s27
      %s31 = sphi 0, %s30
      %s47 = sphi 0, %s31
      %s51 = sphi 0, %s51
      %s53 = sphi 0, %s51
      %s54 = sphi 0, %s53
      %s68 = sphi 0, %s54
      %s72 = sphi 0, %s72
      %s74 = sphi 0, %s72
      %s75 = sphi 0, %s74
      %s89 = sphi 0, %s75
      %s93 = sphi 0, %s93
      %s95 = sphi 0, %s93
      %s96 = sphi 0, %s95
      %s110 = sphi 0, %s96
      %s114 = sphi 0, %s114
      %s116 = sphi 0, %s114
      %s117 = sphi 0, %s116
      %s131 = sphi 0, %s117
      %s135 = sphi 0, %s135
      %s137 = sphi 0, %s135
      %s138 = sphi 0, %s137
      %s152 = sphi 0, %s138
      %s156 = sphi 0, %s156
      %s158 = sphi 0, %s156
      %s159 = sphi 0, %s158
      %s173 = sphi 0, %s159
      %s179 = sphi 0, %s181
      %s182 = sphi 0, %s179
      %s183 = sphi 0, %s182
      %s199 = sphi 0, %s183
    $region4: #{tpu_custom_call.1} parent=1 // loop_header_branch
      %20 = sbr.rel (%p18) target = $region8
    $region5: #{tpu_custom_call.1} parent=1 // loop_body
      %s22 = ssub.s32 %s17, 1
      %s23 = ssub.s32 %s17, 2
      %s24 = sadd.s32 %s17, 1
      %s25 = ssub.s32 %s17, %s24
      %p26 = scmp.eq.s32.totalorder %s25, 0
      %s28 = sadd.s32 %s27, 1
      %s29 = scalar_select %p26, %s27, %s28
      %p32 = pneg %p26
      %p33 = scmp.eq.s32.totalorder %s17, 1
      %p34 = por %p32, %p33
      %p35 = scmp.ne.s32.totalorder %s27, %s30
      %p36 = scmp.eq.s32.totalorder %s17, 0
      %p37 = por %p35, %p36
      %p38 = scmp.ne.s32.totalorder %s27, %s30
      %p39 = scmp.eq.s32.totalorder %s22, 1
      %p40 = por %p38, %p39
      %p41 = scmp.ne.s32.totalorder %s30, %s31
      %p42 = scmp.eq.s32.totalorder %s22, 0
      %p43 = por %p41, %p42
      %p44 = scmp.ne.s32.totalorder %s30, %s31
      %p45 = scmp.eq.s32.totalorder %s23, 1
      %p46 = por %p44, %p45
      %p48 = scmp.ne.s32.totalorder %s31, %s47
      %p49 = scmp.eq.s32.totalorder %s23, 0
      %p50 = por %p48, %p49
      %s52 = sadd.s32 %s51, 1
      %p55 = scmp.eq.s32.totalorder %s17, 1
      %p56 = scmp.ne.s32.totalorder %s51, %s53
      %p57 = scmp.eq.s32.totalorder %s17, 0
      %p58 = por %p56, %p57
      %p59 = scmp.ne.s32.totalorder %s51, %s53
      %p60 = scmp.eq.s32.totalorder %s22, 1
      %p61 = por %p59, %p60
      %p62 = scmp.ne.s32.totalorder %s53, %s54
      %p63 = scmp.eq.s32.totalorder %s22, 0
      %p64 = por %p62, %p63
      %p65 = scmp.ne.s32.totalorder %s53, %s54
      %p66 = scmp.eq.s32.totalorder %s23, 1
      %p67 = por %p65, %p66
      %p69 = scmp.ne.s32.totalorder %s54, %s68
      %p70 = scmp.eq.s32.totalorder %s23, 0
      %p71 = por %p69, %p70
      %s73 = sadd.s32 %s72, 1
      %p76 = scmp.eq.s32.totalorder %s17, 1
      %p77 = scmp.ne.s32.totalorder %s72, %s74
      %p78 = scmp.eq.s32.totalorder %s17, 0
      %p79 = por %p77, %p78
      %p80 = scmp.ne.s32.totalorder %s72, %s74
      %p81 = scmp.eq.s32.totalorder %s22, 1
      %p82 = por %p80, %p81
      %p83 = scmp.ne.s32.totalorder %s74, %s75
      %p84 = scmp.eq.s32.totalorder %s22, 0
      %p85 = por %p83, %p84
      %p86 = scmp.ne.s32.totalorder %s74, %s75
      %p87 = scmp.eq.s32.totalorder %s23, 1
      %p88 = por %p86, %p87
      %p90 = scmp.ne.s32.totalorder %s75, %s89
      %p91 = scmp.eq.s32.totalorder %s23, 0
      %p92 = por %p90, %p91
      %s94 = sadd.s32 %s93, 1
      %p97 = scmp.eq.s32.totalorder %s17, 1
      %p98 = scmp.ne.s32.totalorder %s93, %s95
      %p99 = scmp.eq.s32.totalorder %s17, 0
      %p100 = por %p98, %p99
      %p101 = scmp.ne.s32.totalorder %s93, %s95
      %p102 = scmp.eq.s32.totalorder %s22, 1
      %p103 = por %p101, %p102
      %p104 = scmp.ne.s32.totalorder %s95, %s96
      %p105 = scmp.eq.s32.totalorder %s22, 0
      %p106 = por %p104, %p105
      %p107 = scmp.ne.s32.totalorder %s95, %s96
      %p108 = scmp.eq.s32.totalorder %s23, 1
      %p109 = por %p107, %p108
      %p111 = scmp.ne.s32.totalorder %s96, %s110
      %p112 = scmp.eq.s32.totalorder %s23, 0
      %p113 = por %p111, %p112
      %s115 = sadd.s32 %s114, 1
      %p118 = scmp.eq.s32.totalorder %s17, 1
      %p119 = scmp.ne.s32.totalorder %s114, %s116
      %p120 = scmp.eq.s32.totalorder %s17, 0
      %p121 = por %p119, %p120
      %p122 = scmp.ne.s32.totalorder %s114, %s116
      %p123 = scmp.eq.s32.totalorder %s22, 1
      %p124 = por %p122, %p123
      %p125 = scmp.ne.s32.totalorder %s116, %s117
      %p126 = scmp.eq.s32.totalorder %s22, 0
      %p127 = por %p125, %p126
      %p128 = scmp.ne.s32.totalorder %s116, %s117
      %p129 = scmp.eq.s32.totalorder %s23, 1
      %p130 = por %p128, %p129
      %p132 = scmp.ne.s32.totalorder %s117, %s131
      %p133 = scmp.eq.s32.totalorder %s23, 0
      %p134 = por %p132, %p133
      %s136 = sadd.s32 %s135, 1
      %p139 = scmp.eq.s32.totalorder %s17, 1
      %p140 = scmp.ne.s32.totalorder %s135, %s137
      %p141 = scmp.eq.s32.totalorder %s17, 0
      %p142 = por %p140, %p141
      %p143 = scmp.ne.s32.totalorder %s135, %s137
      %p144 = scmp.eq.s32.totalorder %s22, 1
      %p145 = por %p143, %p144
      %p146 = scmp.ne.s32.totalorder %s137, %s138
      %p147 = scmp.eq.s32.totalorder %s22, 0
      %p148 = por %p146, %p147
      %p149 = scmp.ne.s32.totalorder %s137, %s138
      %p150 = scmp.eq.s32.totalorder %s23, 1
      %p151 = por %p149, %p150
      %p153 = scmp.ne.s32.totalorder %s138, %s152
      %p154 = scmp.eq.s32.totalorder %s23, 0
      %p155 = por %p153, %p154
      %s157 = sadd.s32 %s156, 1
      %p160 = scmp.eq.s32.totalorder %s17, 1
      %p161 = scmp.ne.s32.totalorder %s156, %s158
      %p162 = scmp.eq.s32.totalorder %s17, 0
      %p163 = por %p161, %p162
      %p164 = scmp.ne.s32.totalorder %s156, %s158
      %p165 = scmp.eq.s32.totalorder %s22, 1
      %p166 = por %p164, %p165
      %p167 = scmp.ne.s32.totalorder %s158, %s159
      %p168 = scmp.eq.s32.totalorder %s22, 0
      %p169 = por %p167, %p168
      %p170 = scmp.ne.s32.totalorder %s158, %s159
      %p171 = scmp.eq.s32.totalorder %s23, 1
      %p172 = por %p170, %p171
      %p174 = scmp.ne.s32.totalorder %s159, %s173
      %p175 = scmp.eq.s32.totalorder %s23, 0
      %p176 = por %p174, %p175
      %s177 = ssub.s32 %s17, %s24
      %p178 = scmp.eq.s32.totalorder %s177, 0
      %s180 = sadd.s32 %s179, 1
      %s181 = scalar_select %p178, %s179, %s180
      %p184 = pneg %p178
      %p185 = scmp.eq.s32.totalorder %s17, 1
      %p186 = por %p184, %p185
      %p187 = scmp.ne.s32.totalorder %s179, %s182
      %p188 = scmp.eq.s32.totalorder %s17, 0
      %p189 = por %p187, %p188
      %p190 = scmp.ne.s32.totalorder %s179, %s182
      %p191 = scmp.eq.s32.totalorder %s22, 1
      %p192 = por %p190, %p191
      %p193 = scmp.ne.s32.totalorder %s182, %s183
      %p194 = scmp.eq.s32.totalorder %s22, 0
      %p195 = por %p193, %p194
      %p196 = scmp.ne.s32.totalorder %s182, %s183
      %p197 = scmp.eq.s32.totalorder %s23, 1
      %p198 = por %p196, %p197
      %p200 = scmp.ne.s32.totalorder %s183, %s199
      %p201 = scmp.eq.s32.totalorder %s23, 0
      %p202 = por %p200, %p201
      %p203 = scmp.le.s32.totalorder 1, %s17
      %p204 = scmp.lt.s32.totalorder %s17, 3
      %p205 = pnand %p203, %p204
      %p206 = pneg %p205
      // Predicated region
      $region9: #{tpu_custom_call.1} parent=5 // pred_check
        _
      $region10: #{tpu_custom_call.1} parent=5 // pred_check_branch
        %208 = sbr.rel (%p205) target = $region12
      $region11: #{tpu_custom_call.1} parent=5 // pred_region
        %s209 = ssub.s32 %s17, 1
        // Predicated region
        $region13: #{tpu_custom_call.1} parent=11 // pred_check
          %p210 = pneg %p64
        $region14: #{tpu_custom_call.1} parent=11 // pred_check_branch
          %212 = sbr.rel (%p210) target = $region16
        $region15: #{tpu_custom_call.1} parent=11 // pred_region
          _
        $region16: #{tpu_custom_call.1} parent=11 // pred_fallthru
          _
        // Predicated region
        $region17: #{tpu_custom_call.1} parent=11 // pred_check
          %p213 = pneg %p85
        $region18: #{tpu_custom_call.1} parent=11 // pred_check_branch
          %215 = sbr.rel (%p213) target = $region20
        $region19: #{tpu_custom_call.1} parent=11 // pred_region
          _
        $region20: #{tpu_custom_call.1} parent=11 // pred_fallthru
          _
        // Predicated region
        $region21: #{tpu_custom_call.1} parent=11 // pred_check
          %p216 = pneg %p106
        $region22: #{tpu_custom_call.1} parent=11 // pred_check_branch
          %218 = sbr.rel (%p216) target = $region24
        $region23: #{tpu_custom_call.1} parent=11 // pred_region
          _
        $region24: #{tpu_custom_call.1} parent=11 // pred_fallthru
          _
        // Predicated region
        $region25: #{tpu_custom_call.1} parent=11 // pred_check
          %p219 = pneg %p127
        $region26: #{tpu_custom_call.1} parent=11 // pred_check_branch
          %221 = sbr.rel (%p219) target = $region28
        $region27: #{tpu_custom_call.1} parent=11 // pred_region
          _
        $region28: #{tpu_custom_call.1} parent=11 // pred_fallthru
          _
        // Predicated region
        $region29: #{tpu_custom_call.1} parent=11 // pred_check
          %p222 = pneg %p148
        $region30: #{tpu_custom_call.1} parent=11 // pred_check_branch
          %224 = sbr.rel (%p222) target = $region32
        $region31: #{tpu_custom_call.1} parent=11 // pred_region
          _
        $region32: #{tpu_custom_call.1} parent=11 // pred_fallthru
          _
        // Predicated region
        $region33: #{tpu_custom_call.1} parent=11 // pred_check
          %p225 = pneg %p169
        $region34: #{tpu_custom_call.1} parent=11 // pred_check_branch
          %227 = sbr.rel (%p225) target = $region36
        $region35: #{tpu_custom_call.1} parent=11 // pred_region
          _
        $region36: #{tpu_custom_call.1} parent=11 // pred_fallthru
          _
      $region12: #{tpu_custom_call.1} parent=5 // pred_fallthru
        _
      %p228 = scmp.lt.s32.totalorder %s17, 2
      // Predicated region
      $region37: #{tpu_custom_call.1} parent=5 // pred_check
        %p229 = pneg %p228
      $region38: #{tpu_custom_call.1} parent=5 // pred_check_branch
        %231 = sbr.rel (%p229) target = $region40
      $region39: #{tpu_custom_call.1} parent=5 // pred_region
        // Predicated region
        $region41: #{tpu_custom_call.1} parent=39 // pred_check
          %p232 = pneg %p37
        $region42: #{tpu_custom_call.1} parent=39 // pred_check_branch
          %234 = sbr.rel (%p232) target = $region44
        $region43: #{tpu_custom_call.1} parent=39 // pred_region
          %s235 = smul.u32 32, %s17
          %p236 = scmp.lt.s32.totalorder %s235, 63
          %s237 = scalar_select %p236, %s235, 63
          %s238 = smul.addr %s237, 8
          %s239 = scalar_lea.vmem %s0, %s238
          %s240 = smul.u32 32, %s17
        $region44: #{tpu_custom_call.1} parent=39 // pred_fallthru
          _
      $region40: #{tpu_custom_call.1} parent=5 // pred_fallthru
        _
      %p241 = scmp.le.s32.totalorder 1, %s17
      %p242 = scmp.lt.s32.totalorder %s17, 3
      %p243 = pnand %p241, %p242
      %p244 = pneg %p243
      // Predicated region
      $region45: #{tpu_custom_call.1} parent=5 // pred_check
        _
      $region46: #{tpu_custom_call.1} parent=5 // pred_check_branch
        %246 = sbr.rel (%p243) target = $region48
      $region47: #{tpu_custom_call.1} parent=5 // pred_region
        %s247 = ssub.s32 %s17, 1
        %s248 = smul.u32 32, %s22
        %p249 = scmp.lt.s32.totalorder %s248, 63
        %s250 = scalar_select %p249, %s248, 63
        %s251 = smul.addr %s250, 8
        %s252 = scalar_lea.vmem %s0, %s251
        %p253 = pneg %p43
        %p254 = pneg %p40
        %p255 = pneg %p64
        %p256 = pneg %p61
        %p257 = pneg %p85
        %p258 = pneg %p82
        %p259 = pneg %p106
        %p260 = pneg %p103
        %p261 = pneg %p127
        %p262 = pneg %p124
        %p263 = pneg %p148
        %p264 = pneg %p145
        %p265 = pneg %p169
        %p266 = pneg %p166
        %p267 = pneg %p195
        %p268 = pneg %p192
        %s269 = sand.u32 %s182, 1
        %s270 = scalar_lea.sflag [#allocation4], %s269
        %s271 = sand.u32 %s182, 1
        %s272 = smul.addr %s271, 2
        %s273 = scalar_lea.vmem [#allocation3], %s272
        %s274 = smul.u32 32, %s22
        %p275 = scmp.lt.s32.totalorder %s274, 63
        %s276 = scalar_select %p275, %s274, 63
        %s277 = smul.addr %s276, 8
        %s278 = scalar_lea.vmem %s0, %s277
        %s279 = smul.u32 32, %s22
        %s280 = smul.u32 2, %s22
        %v281 = vld [vmem:[%s278] sm:$0xff]
        %v282 = vld [vmem:[%s278 + $0x8] sm:$0xff]
        %v283 = vld [vmem:[%s278 + $0x10] sm:$0xff]
        %v284 = vld [vmem:[%s278 + $0x18] sm:$0xff]
        %v285 = vld [vmem:[%s278 + $0x20] sm:$0xff]
        %v286 = vld [vmem:[%s278 + $0x28] sm:$0xff]
        %v287 = vld [vmem:[%s278 + $0x30] sm:$0xff]
        %v288 = vld [vmem:[%s278 + $0x38] sm:$0xff]
        %v289 = vld [vmem:[%s278 + $0x40] sm:$0xff]
        %v290 = vld [vmem:[%s278 + $0x48] sm:$0xff]
        %v291 = vld [vmem:[%s278 + $0x50] sm:$0xff]
        %v292 = vld [vmem:[%s278 + $0x58] sm:$0xff]
        %v293 = vld [vmem:[%s278 + $0x60] sm:$0xff]
        %v294 = vld [vmem:[%s278 + $0x68] sm:$0xff]
        %v295 = vld [vmem:[%s278 + $0x70] sm:$0xff]
        %v296 = vld [vmem:[%s278 + $0x78] sm:$0xff]
        %v297 = vld [vmem:[%s278 + $0x80] sm:$0xff]
        %v298 = vld [vmem:[%s278 + $0x88] sm:$0xff]
        %v299 = vld [vmem:[%s278 + $0x90] sm:$0xff]
        %v300 = vld [vmem:[%s278 + $0x98] sm:$0xff]
        %v301 = vld [vmem:[%s278 + $0xa0] sm:$0xff]
        %v302 = vld [vmem:[%s278 + $0xa8] sm:$0xff]
        %v303 = vld [vmem:[%s278 + $0xb0] sm:$0xff]
        %v304 = vld [vmem:[%s278 + $0xb8] sm:$0xff]
        %v305 = vld [vmem:[%s278 + $0xc0] sm:$0xff]
        %v306 = vld [vmem:[%s278 + $0xc8] sm:$0xff]
        %v307 = vld [vmem:[%s278 + $0xd0] sm:$0xff]
        %v308 = vld [vmem:[%s278 + $0xd8] sm:$0xff]
        %v309 = vld [vmem:[%s278 + $0xe0] sm:$0xff]
        %v310 = vld [vmem:[%s278 + $0xe8] sm:$0xff]
        %v311 = vld [vmem:[%s278 + $0xf0] sm:$0xff]
        %v312 = vld [vmem:[%s278 + $0xf8] sm:$0xff]
        %v313 = vld [vmem:[%s1] sm:$0xff]
        %v314 = vld [vmem:[%s1 + $0x8] sm:$0xff]
        %v315 = vld [vmem:[%s1 + $0x10] sm:$0xff]
        %v316 = vld [vmem:[%s1 + $0x18] sm:$0xff]
        %v317 = vld [vmem:[%s2] sm:$0x1]
        %v319 = vlaneseq
        %v320 = vshrl.u32 %v319, 7
        %v321 = vsub.s32 0, %v320
        %v322 = vrot.slane %v317, %v321
        %vm324 = vcmask 261120
        %v326 = vsel %vm324, %v281, 0
        %v329 = vsel %vm324, %v282, 0
        %v332 = vsel %vm324, %v283, 0
        %v335 = vsel %vm324, %v284, 0
        %v338 = vsel %vm324, %v285, 0
        %v341 = vsel %vm324, %v286, 0
        %v344 = vsel %vm324, %v287, 0
        %v347 = vsel %vm324, %v288, 0
        %v350 = vsel %vm324, %v289, 0
        %v353 = vsel %vm324, %v290, 0
        %v356 = vsel %vm324, %v291, 0
        %v359 = vsel %vm324, %v292, 0
        %v362 = vsel %vm324, %v293, 0
        %v365 = vsel %vm324, %v294, 0
        %v368 = vsel %vm324, %v295, 0
        %v371 = vsel %vm324, %v296, 0
        %v374 = vsel %vm324, %v297, 0
        %v377 = vsel %vm324, %v298, 0
        %v380 = vsel %vm324, %v299, 0
        %v383 = vsel %vm324, %v300, 0
        %v386 = vsel %vm324, %v301, 0
        %v389 = vsel %vm324, %v302, 0
        %v392 = vsel %vm324, %v303, 0
        %v395 = vsel %vm324, %v304, 0
        %v398 = vsel %vm324, %v305, 0
        %v401 = vsel %vm324, %v306, 0
        %v404 = vsel %vm324, %v307, 0
        %v407 = vsel %vm324, %v308, 0
        %v410 = vsel %vm324, %v309, 0
        %v413 = vsel %vm324, %v310, 0
        %v416 = vsel %vm324, %v311, 0
        %v419 = vsel %vm324, %v312, 0
        %421 = vmatprep.subr.mxu0 0.0
        %422 = vmatpush1.msra.mxu0 0.0
        %423 = vmatprep.subr.mxu0 0.0
        %424 = vmatpush1.msra.mxu0 0.0
        %425 = vmatprep.subr.mxu0 0.0
        %426 = vmatpush1.msra.mxu0 0.0
        %427 = vmatprep.subr.mxu0 0.0
        %428 = vmatpush1.msra.mxu0 0.0
        %429 = vmatprep.subr.mxu0 0.0
        %430 = vmatpush1.msra.mxu0 0.0
        %431 = vmatprep.subr.mxu0 0.0
        %432 = vmatpush1.msra.mxu0 0.0
        %433 = vmatprep.subr.mxu0 0.0
        %434 = vmatpush1.msra.mxu0 0.0
        %435 = vmatprep.subr.mxu0 0.0
        %436 = vmatpush1.msra.mxu0 0.0
        %437 = vmatprep.subr.mxu0 0.0
        %438 = vmatpush1.msra.mxu0 0.0
        %439 = vmatprep.subr.mxu0 0.0
        %440 = vmatpush1.msra.mxu0 0.0
        %441 = vmatprep.subr.mxu0 0.0
        %442 = vmatpush1.msra.mxu0 0.0
        %443 = vmatprep.subr.mxu0 0.0
        %444 = vmatpush1.msra.mxu0 0.0
        %445 = vmatprep.subr.mxu0 0.0
        %446 = vmatpush1.msra.mxu0 %v316
        %447 = vmatprep.subr.mxu0 0.0
        %448 = vmatpush1.msra.mxu0 %v315
        %449 = vmatprep.subr.mxu0 0.0
        %450 = vmatpush1.msra.mxu0 %v314
        %451 = vmatprep.subr.mxu0 0.0
        %452 = vmatpush1.msra.mxu0 %v313
        %453 = vmatprep.subr.mxu0 0.0
        %454 = vmatpush2.msra.mxu0 0.0
        %455 = vmatprep.subr.mxu0 0.0
        %456 = vmatpush2.msra.mxu0 0.0
        %457 = vmatprep.subr.mxu0 0.0
        %458 = vmatpush2.msra.mxu0 0.0
        %459 = vmatprep.subr.mxu0 0.0
        %460 = vmatpush2.msra.mxu0 0.0
        %461 = vmatprep.subr.mxu0 0.0
        %462 = vmatpush2.msra.mxu0 0.0
        %463 = vmatprep.subr.mxu0 0.0
        %464 = vmatpush2.msra.mxu0 0.0
        %465 = vmatprep.subr.mxu0 0.0
        %466 = vmatpush2.msra.mxu0 0.0
        %467 = vmatprep.subr.mxu0 0.0
        %468 = vmatpush2.msra.mxu0 0.0
        %469 = vmatprep.subr.mxu0 0.0
        %470 = vmatpush2.msra.mxu0 0.0
        %471 = vmatprep.subr.mxu0 0.0
        %472 = vmatpush2.msra.mxu0 0.0
        %473 = vmatprep.subr.mxu0 0.0
        %474 = vmatpush2.msra.mxu0 0.0
        %475 = vmatprep.subr.mxu0 0.0
        %476 = vmatpush2.msra.mxu0 0.0
        %477 = vmatprep.subr.mxu0 0.0
        %478 = vmatpush2.msra.mxu0 0.0
        %479 = vmatprep.subr.mxu0 0.0
        %480 = vmatpush2.msra.mxu0 0.0
        %481 = vmatprep.subr.mxu0 0.0
        %482 = vmatpush2.msra.mxu0 0.0
        %483 = vmatprep.subr.mxu0 0.0
        %484 = vmatpush2.msra.mxu0 0.0
        %485 = vmatprep.mubr.f32.mxu0 0.0
        %486 = vmatmul.mubr.f32.gmra.mxu0 %v326
        %v487 = vpop.f32.mrf.mxu0
        %v488 = vadd.f32 %v322, %v487
        %v489 = vpop.f32.mrf.mxu0
        %490 = vmatprep.mubr.f32.mxu0 0.0
        %491 = vmatmul.mubr.f32.gmra.mxu0 %v329
        %v492 = vpop.f32.mrf.mxu0
        %v493 = vadd.f32 %v322, %v492
        %v494 = vpop.f32.mrf.mxu0
        %495 = vmatprep.mubr.f32.mxu0 0.0
        %496 = vmatmul.mubr.f32.gmra.mxu0 %v332
        %v497 = vpop.f32.mrf.mxu0
        %v498 = vadd.f32 %v322, %v497
        %v499 = vpop.f32.mrf.mxu0
        %500 = vmatprep.mubr.f32.mxu0 0.0
        %501 = vmatmul.mubr.f32.gmra.mxu0 %v335
        %v502 = vpop.f32.mrf.mxu0
        %v503 = vadd.f32 %v322, %v502
        %v504 = vpop.f32.mrf.mxu0
        %505 = vmatprep.mubr.f32.mxu0 0.0
        %506 = vmatmul.mubr.f32.gmra.mxu0 %v338
        %v507 = vpop.f32.mrf.mxu0
        %v508 = vadd.f32 %v322, %v507
        %v509 = vpop.f32.mrf.mxu0
        %510 = vmatprep.mubr.f32.mxu0 0.0
        %511 = vmatmul.mubr.f32.gmra.mxu0 %v341
        %v512 = vpop.f32.mrf.mxu0
        %v513 = vadd.f32 %v322, %v512
        %v514 = vpop.f32.mrf.mxu0
        %515 = vmatprep.mubr.f32.mxu0 0.0
        %516 = vmatmul.mubr.f32.gmra.mxu0 %v344
        %v517 = vpop.f32.mrf.mxu0
        %v518 = vadd.f32 %v322, %v517
        %v519 = vpop.f32.mrf.mxu0
        %520 = vmatprep.mubr.f32.mxu0 0.0
        %521 = vmatmul.mubr.f32.gmra.mxu0 %v347
        %v522 = vpop.f32.mrf.mxu0
        %v523 = vadd.f32 %v322, %v522
        %v524 = vpop.f32.mrf.mxu0
        %525 = vmatprep.mubr.f32.mxu0 0.0
        %526 = vmatmul.mubr.f32.gmra.mxu0 %v350
        %v527 = vpop.f32.mrf.mxu0
        %v528 = vadd.f32 %v322, %v527
        %v529 = vpop.f32.mrf.mxu0
        %530 = vmatprep.mubr.f32.mxu0 0.0
        %531 = vmatmul.mubr.f32.gmra.mxu0 %v353
        %v532 = vpop.f32.mrf.mxu0
        %v533 = vadd.f32 %v322, %v532
        %v534 = vpop.f32.mrf.mxu0
        %535 = vmatprep.mubr.f32.mxu0 0.0
        %536 = vmatmul.mubr.f32.gmra.mxu0 %v356
        %v537 = vpop.f32.mrf.mxu0
        %v538 = vadd.f32 %v322, %v537
        %v539 = vpop.f32.mrf.mxu0
        %540 = vmatprep.mubr.f32.mxu0 0.0
        %541 = vmatmul.mubr.f32.gmra.mxu0 %v359
        %v542 = vpop.f32.mrf.mxu0
        %v543 = vadd.f32 %v322, %v542
        %v544 = vpop.f32.mrf.mxu0
        %545 = vmatprep.mubr.f32.mxu0 0.0
        %546 = vmatmul.mubr.f32.gmra.mxu0 %v362
        %v547 = vpop.f32.mrf.mxu0
        %v548 = vadd.f32 %v322, %v547
        %v549 = vpop.f32.mrf.mxu0
        %550 = vmatprep.mubr.f32.mxu0 0.0
        %551 = vmatmul.mubr.f32.gmra.mxu0 %v365
        %v552 = vpop.f32.mrf.mxu0
        %v553 = vadd.f32 %v322, %v552
        %v554 = vpop.f32.mrf.mxu0
        %555 = vmatprep.mubr.f32.mxu0 0.0
        %556 = vmatmul.mubr.f32.gmra.mxu0 %v368
        %v557 = vpop.f32.mrf.mxu0
        %v558 = vadd.f32 %v322, %v557
        %v559 = vpop.f32.mrf.mxu0
        %560 = vmatprep.mubr.f32.mxu0 0.0
        %561 = vmatmul.mubr.f32.gmra.mxu0 %v371
        %v562 = vpop.f32.mrf.mxu0
        %v563 = vadd.f32 %v322, %v562
        %v564 = vpop.f32.mrf.mxu0
        %565 = vmatprep.mubr.f32.mxu0 0.0
        %566 = vmatmul.mubr.f32.gmra.mxu0 %v374
        %v567 = vpop.f32.mrf.mxu0
        %v568 = vadd.f32 %v322, %v567
        %v569 = vpop.f32.mrf.mxu0
        %570 = vmatprep.mubr.f32.mxu0 0.0
        %571 = vmatmul.mubr.f32.gmra.mxu0 %v377
        %v572 = vpop.f32.mrf.mxu0
        %v573 = vadd.f32 %v322, %v572
        %v574 = vpop.f32.mrf.mxu0
        %575 = vmatprep.mubr.f32.mxu0 0.0
        %576 = vmatmul.mubr.f32.gmra.mxu0 %v380
        %v577 = vpop.f32.mrf.mxu0
        %v578 = vadd.f32 %v322, %v577
        %v579 = vpop.f32.mrf.mxu0
        %580 = vmatprep.mubr.f32.mxu0 0.0
        %581 = vmatmul.mubr.f32.gmra.mxu0 %v383
        %v582 = vpop.f32.mrf.mxu0
        %v583 = vadd.f32 %v322, %v582
        %v584 = vpop.f32.mrf.mxu0
        %585 = vmatprep.mubr.f32.mxu0 0.0
        %586 = vmatmul.mubr.f32.gmra.mxu0 %v386
        %v587 = vpop.f32.mrf.mxu0
        %v588 = vadd.f32 %v322, %v587
        %v589 = vpop.f32.mrf.mxu0
        %590 = vmatprep.mubr.f32.mxu0 0.0
        %591 = vmatmul.mubr.f32.gmra.mxu0 %v389
        %v592 = vpop.f32.mrf.mxu0
        %v593 = vadd.f32 %v322, %v592
        %v594 = vpop.f32.mrf.mxu0
        %595 = vmatprep.mubr.f32.mxu0 0.0
        %596 = vmatmul.mubr.f32.gmra.mxu0 %v392
        %v597 = vpop.f32.mrf.mxu0
        %v598 = vadd.f32 %v322, %v597
        %v599 = vpop.f32.mrf.mxu0
        %600 = vmatprep.mubr.f32.mxu0 0.0
        %601 = vmatmul.mubr.f32.gmra.mxu0 %v395
        %v602 = vpop.f32.mrf.mxu0
        %v603 = vadd.f32 %v322, %v602
        %v604 = vpop.f32.mrf.mxu0
        %605 = vmatprep.mubr.f32.mxu0 0.0
        %606 = vmatmul.mubr.f32.gmra.mxu0 %v398
        %v607 = vpop.f32.mrf.mxu0
        %v608 = vadd.f32 %v322, %v607
        %v609 = vpop.f32.mrf.mxu0
        %610 = vmatprep.mubr.f32.mxu0 0.0
        %611 = vmatmul.mubr.f32.gmra.mxu0 %v401
        %v612 = vpop.f32.mrf.mxu0
        %v613 = vadd.f32 %v322, %v612
        %v614 = vpop.f32.mrf.mxu0
        %615 = vmatprep.mubr.f32.mxu0 0.0
        %616 = vmatmul.mubr.f32.gmra.mxu0 %v404
        %v617 = vpop.f32.mrf.mxu0
        %v618 = vadd.f32 %v322, %v617
        %v619 = vpop.f32.mrf.mxu0
        %620 = vmatprep.mubr.f32.mxu0 0.0
        %621 = vmatmul.mubr.f32.gmra.mxu0 %v407
        %v622 = vpop.f32.mrf.mxu0
        %v623 = vadd.f32 %v322, %v622
        %v624 = vpop.f32.mrf.mxu0
        %625 = vmatprep.mubr.f32.mxu0 0.0
        %626 = vmatmul.mubr.f32.gmra.mxu0 %v410
        %v627 = vpop.f32.mrf.mxu0
        %v628 = vadd.f32 %v322, %v627
        %v629 = vpop.f32.mrf.mxu0
        %630 = vmatprep.mubr.f32.mxu0 0.0
        %631 = vmatmul.mubr.f32.gmra.mxu0 %v413
        %v632 = vpop.f32.mrf.mxu0
        %v633 = vadd.f32 %v322, %v632
        %v634 = vpop.f32.mrf.mxu0
        %635 = vmatprep.mubr.f32.mxu0 0.0
        %636 = vmatmul.mubr.f32.gmra.mxu0 %v416
        %v637 = vpop.f32.mrf.mxu0
        %v638 = vadd.f32 %v322, %v637
        %v639 = vpop.f32.mrf.mxu0
        %640 = vmatprep.mubr.f32.mxu0 0.0
        %641 = vmatmul.mubr.f32.gmra.mxu0 %v419
        %v642 = vpop.f32.mrf.mxu0
        %v643 = vadd.f32 %v322, %v642
        %v644 = vpop.f32.mrf.mxu0
        %645 = vdwg.mxu0
        %v646 = vtanh.pop %v488
        %v647 = vtanh.pop %v493
        %v648 = vtanh.pop %v498
        %v649 = vtanh.pop %v503
        %v650 = vtanh.pop %v508
        %v651 = vtanh.pop %v513
        %v652 = vtanh.pop %v518
        %v653 = vtanh.pop %v523
        %v654 = vtanh.pop %v528
        %v655 = vtanh.pop %v533
        %v656 = vtanh.pop %v538
        %v657 = vtanh.pop %v543
        %v658 = vtanh.pop %v548
        %v659 = vtanh.pop %v553
        %v660 = vtanh.pop %v558
        %v661 = vtanh.pop %v563
        %v662 = vtanh.pop %v568
        %v663 = vtanh.pop %v573
        %v664 = vtanh.pop %v578
        %v665 = vtanh.pop %v583
        %v666 = vtanh.pop %v588
        %v667 = vtanh.pop %v593
        %v668 = vtanh.pop %v598
        %v669 = vtanh.pop %v603
        %v670 = vtanh.pop %v608
        %v671 = vtanh.pop %v613
        %v672 = vtanh.pop %v618
        %v673 = vtanh.pop %v623
        %v674 = vtanh.pop %v628
        %v675 = vtanh.pop %v633
        %v676 = vtanh.pop %v638
        %v677 = vtanh.pop %v643
        %v678 = vld [vmem:[%s3] sm:$0xff]
        %v679 = vld [vmem:[%s3 + $0x8] sm:$0xff]
        %v680 = vld [vmem:[%s3 + $0x10] sm:$0xff]
        %v681 = vld [vmem:[%s3 + $0x18] sm:$0xff]
        %v682 = vld [vmem:[%s3 + $0x20] sm:$0xff]
        %v683 = vld [vmem:[%s3 + $0x28] sm:$0xff]
        %v684 = vld [vmem:[%s3 + $0x30] sm:$0xff]
        %v685 = vld [vmem:[%s3 + $0x38] sm:$0xff]
        %v686 = vld [vmem:[%s3 + $0x40] sm:$0xff]
        %v687 = vld [vmem:[%s3 + $0x48] sm:$0xff]
        %v688 = vld [vmem:[%s3 + $0x50] sm:$0xff]
        %v689 = vld [vmem:[%s3 + $0x58] sm:$0xff]
        %v690 = vld [vmem:[%s3 + $0x60] sm:$0xff]
        %v691 = vld [vmem:[%s3 + $0x68] sm:$0xff]
        %v692 = vld [vmem:[%s3 + $0x70] sm:$0xff]
        %v693 = vld [vmem:[%s3 + $0x78] sm:$0xff]
        %v694 = vld [vmem:[%s4] sm:$0x1]
        %v696 = vlaneseq
        %v697 = vshrl.u32 %v696, 7
        %v698 = vsub.s32 0, %v697
        %v699 = vrot.slane %v694, %v698
        %701 = vmatprep.subr.mxu0 0.0
        %702 = vmatpush1.msra.mxu0 %v693
        %703 = vmatprep.subr.mxu0 0.0
        %704 = vmatpush1.msra.mxu0 %v692
        %705 = vmatprep.subr.mxu0 0.0
        %706 = vmatpush1.msra.mxu0 %v691
        %707 = vmatprep.subr.mxu0 0.0
        %708 = vmatpush1.msra.mxu0 %v690
        %709 = vmatprep.subr.mxu0 0.0
        %710 = vmatpush1.msra.mxu0 %v689
        %711 = vmatprep.subr.mxu0 0.0
        %712 = vmatpush1.msra.mxu0 %v688
        %713 = vmatprep.subr.mxu0 0.0
        %714 = vmatpush1.msra.mxu0 %v687
        %715 = vmatprep.subr.mxu0 0.0
        %716 = vmatpush1.msra.mxu0 %v686
        %717 = vmatprep.subr.mxu0 0.0
        %718 = vmatpush1.msra.mxu0 %v685
        %719 = vmatprep.subr.mxu0 0.0
        %720 = vmatpush1.msra.mxu0 %v684
        %721 = vmatprep.subr.mxu0 0.0
        %722 = vmatpush1.msra.mxu0 %v683
        %723 = vmatprep.subr.mxu0 0.0
        %724 = vmatpush1.msra.mxu0 %v682
        %725 = vmatprep.subr.mxu0 0.0
        %726 = vmatpush1.msra.mxu0 %v681
        %727 = vmatprep.subr.mxu0 0.0
        %728 = vmatpush1.msra.mxu0 %v680
        %729 = vmatprep.subr.mxu0 0.0
        %730 = vmatpush1.msra.mxu0 %v679
        %731 = vmatprep.subr.mxu0 0.0
        %732 = vmatpush1.msra.mxu0 %v678
        %733 = vmatprep.subr.mxu0 0.0
        %734 = vmatpush2.msra.mxu0 0.0
        %735 = vmatprep.subr.mxu0 0.0
        %736 = vmatpush2.msra.mxu0 0.0
        %737 = vmatprep.subr.mxu0 0.0
        %738 = vmatpush2.msra.mxu0 0.0
        %739 = vmatprep.subr.mxu0 0.0
        %740 = vmatpush2.msra.mxu0 0.0
        %741 = vmatprep.subr.mxu0 0.0
        %742 = vmatpush2.msra.mxu0 0.0
        %743 = vmatprep.subr.mxu0 0.0
        %744 = vmatpush2.msra.mxu0 0.0
        %745 = vmatprep.subr.mxu0 0.0
        %746 = vmatpush2.msra.mxu0 0.0
        %747 = vmatprep.subr.mxu0 0.0
        %748 = vmatpush2.msra.mxu0 0.0
        %749 = vmatprep.subr.mxu0 0.0
        %750 = vmatpush2.msra.mxu0 0.0
        %751 = vmatprep.subr.mxu0 0.0
        %752 = vmatpush2.msra.mxu0 0.0
        %753 = vmatprep.subr.mxu0 0.0
        %754 = vmatpush2.msra.mxu0 0.0
        %755 = vmatprep.subr.mxu0 0.0
        %756 = vmatpush2.msra.mxu0 0.0
        %757 = vmatprep.subr.mxu0 0.0
        %758 = vmatpush2.msra.mxu0 0.0
        %759 = vmatprep.subr.mxu0 0.0
        %760 = vmatpush2.msra.mxu0 0.0
        %761 = vmatprep.subr.mxu0 0.0
        %762 = vmatpush2.msra.mxu0 0.0
        %763 = vmatprep.subr.mxu0 0.0
        %764 = vmatpush2.msra.mxu0 0.0
        %765 = vmatprep.mubr.f32.mxu0 0.0
        %766 = vmatmul.mubr.f32.gmra.mxu0 %v646
        %v767 = vpop.f32.mrf.mxu0
        %v768 = vadd.f32 %v699, %v767
        %v769 = vpop.f32.mrf.mxu0
        %770 = vmatprep.mubr.f32.mxu0 0.0
        %771 = vmatmul.mubr.f32.gmra.mxu0 %v647
        %v772 = vpop.f32.mrf.mxu0
        %v773 = vadd.f32 %v699, %v772
        %v774 = vpop.f32.mrf.mxu0
        %775 = vmatprep.mubr.f32.mxu0 0.0
        %776 = vmatmul.mubr.f32.gmra.mxu0 %v648
        %v777 = vpop.f32.mrf.mxu0
        %v778 = vadd.f32 %v699, %v777
        %v779 = vpop.f32.mrf.mxu0
        %780 = vmatprep.mubr.f32.mxu0 0.0
        %781 = vmatmul.mubr.f32.gmra.mxu0 %v649
        %v782 = vpop.f32.mrf.mxu0
        %v783 = vadd.f32 %v699, %v782
        %v784 = vpop.f32.mrf.mxu0
        %785 = vmatprep.mubr.f32.mxu0 0.0
        %786 = vmatmul.mubr.f32.gmra.mxu0 %v650
        %v787 = vpop.f32.mrf.mxu0
        %v788 = vadd.f32 %v699, %v787
        %v789 = vpop.f32.mrf.mxu0
        %790 = vmatprep.mubr.f32.mxu0 0.0
        %791 = vmatmul.mubr.f32.gmra.mxu0 %v651
        %v792 = vpop.f32.mrf.mxu0
        %v793 = vadd.f32 %v699, %v792
        %v794 = vpop.f32.mrf.mxu0
        %795 = vmatprep.mubr.f32.mxu0 0.0
        %796 = vmatmul.mubr.f32.gmra.mxu0 %v652
        %v797 = vpop.f32.mrf.mxu0
        %v798 = vadd.f32 %v699, %v797
        %v799 = vpop.f32.mrf.mxu0
        %800 = vmatprep.mubr.f32.mxu0 0.0
        %801 = vmatmul.mubr.f32.gmra.mxu0 %v653
        %v802 = vpop.f32.mrf.mxu0
        %v803 = vadd.f32 %v699, %v802
        %v804 = vpop.f32.mrf.mxu0
        %805 = vmatprep.mubr.f32.mxu0 0.0
        %806 = vmatmul.mubr.f32.gmra.mxu0 %v654
        %v807 = vpop.f32.mrf.mxu0
        %v808 = vadd.f32 %v699, %v807
        %v809 = vpop.f32.mrf.mxu0
        %810 = vmatprep.mubr.f32.mxu0 0.0
        %811 = vmatmul.mubr.f32.gmra.mxu0 %v655
        %v812 = vpop.f32.mrf.mxu0
        %v813 = vadd.f32 %v699, %v812
        %v814 = vpop.f32.mrf.mxu0
        %815 = vmatprep.mubr.f32.mxu0 0.0
        %816 = vmatmul.mubr.f32.gmra.mxu0 %v656
        %v817 = vpop.f32.mrf.mxu0
        %v818 = vadd.f32 %v699, %v817
        %v819 = vpop.f32.mrf.mxu0
        %820 = vmatprep.mubr.f32.mxu0 0.0
        %821 = vmatmul.mubr.f32.gmra.mxu0 %v657
        %v822 = vpop.f32.mrf.mxu0
        %v823 = vadd.f32 %v699, %v822
        %v824 = vpop.f32.mrf.mxu0
        %825 = vmatprep.mubr.f32.mxu0 0.0
        %826 = vmatmul.mubr.f32.gmra.mxu0 %v658
        %v827 = vpop.f32.mrf.mxu0
        %v828 = vadd.f32 %v699, %v827
        %v829 = vpop.f32.mrf.mxu0
        %830 = vmatprep.mubr.f32.mxu0 0.0
        %831 = vmatmul.mubr.f32.gmra.mxu0 %v659
        %v832 = vpop.f32.mrf.mxu0
        %v833 = vadd.f32 %v699, %v832
        %v834 = vpop.f32.mrf.mxu0
        %835 = vmatprep.mubr.f32.mxu0 0.0
        %836 = vmatmul.mubr.f32.gmra.mxu0 %v660
        %v837 = vpop.f32.mrf.mxu0
        %v838 = vadd.f32 %v699, %v837
        %v839 = vpop.f32.mrf.mxu0
        %840 = vmatprep.mubr.f32.mxu0 0.0
        %841 = vmatmul.mubr.f32.gmra.mxu0 %v661
        %v842 = vpop.f32.mrf.mxu0
        %v843 = vadd.f32 %v699, %v842
        %v844 = vpop.f32.mrf.mxu0
        %845 = vmatprep.mubr.f32.mxu0 0.0
        %846 = vmatmul.mubr.f32.gmra.mxu0 %v662
        %v847 = vpop.f32.mrf.mxu0
        %v848 = vadd.f32 %v699, %v847
        %v849 = vpop.f32.mrf.mxu0
        %850 = vmatprep.mubr.f32.mxu0 0.0
        %851 = vmatmul.mubr.f32.gmra.mxu0 %v663
        %v852 = vpop.f32.mrf.mxu0
        %v853 = vadd.f32 %v699, %v852
        %v854 = vpop.f32.mrf.mxu0
        %855 = vmatprep.mubr.f32.mxu0 0.0
        %856 = vmatmul.mubr.f32.gmra.mxu0 %v664
        %v857 = vpop.f32.mrf.mxu0
        %v858 = vadd.f32 %v699, %v857
        %v859 = vpop.f32.mrf.mxu0
        %860 = vmatprep.mubr.f32.mxu0 0.0
        %861 = vmatmul.mubr.f32.gmra.mxu0 %v665
        %v862 = vpop.f32.mrf.mxu0
        %v863 = vadd.f32 %v699, %v862
        %v864 = vpop.f32.mrf.mxu0
        %865 = vmatprep.mubr.f32.mxu0 0.0
        %866 = vmatmul.mubr.f32.gmra.mxu0 %v666
        %v867 = vpop.f32.mrf.mxu0
        %v868 = vadd.f32 %v699, %v867
        %v869 = vpop.f32.mrf.mxu0
        %870 = vmatprep.mubr.f32.mxu0 0.0
        %871 = vmatmul.mubr.f32.gmra.mxu0 %v667
        %v872 = vpop.f32.mrf.mxu0
        %v873 = vadd.f32 %v699, %v872
        %v874 = vpop.f32.mrf.mxu0
        %875 = vmatprep.mubr.f32.mxu0 0.0
        %876 = vmatmul.mubr.f32.gmra.mxu0 %v668
        %v877 = vpop.f32.mrf.mxu0
        %v878 = vadd.f32 %v699, %v877
        %v879 = vpop.f32.mrf.mxu0
        %880 = vmatprep.mubr.f32.mxu0 0.0
        %881 = vmatmul.mubr.f32.gmra.mxu0 %v669
        %v882 = vpop.f32.mrf.mxu0
        %v883 = vadd.f32 %v699, %v882
        %v884 = vpop.f32.mrf.mxu0
        %885 = vmatprep.mubr.f32.mxu0 0.0
        %886 = vmatmul.mubr.f32.gmra.mxu0 %v670
        %v887 = vpop.f32.mrf.mxu0
        %v888 = vadd.f32 %v699, %v887
        %v889 = vpop.f32.mrf.mxu0
        %890 = vmatprep.mubr.f32.mxu0 0.0
        %891 = vmatmul.mubr.f32.gmra.mxu0 %v671
        %v892 = vpop.f32.mrf.mxu0
        %v893 = vadd.f32 %v699, %v892
        %v894 = vpop.f32.mrf.mxu0
        %895 = vmatprep.mubr.f32.mxu0 0.0
        %896 = vmatmul.mubr.f32.gmra.mxu0 %v672
        %v897 = vpop.f32.mrf.mxu0
        %v898 = vadd.f32 %v699, %v897
        %v899 = vpop.f32.mrf.mxu0
        %900 = vmatprep.mubr.f32.mxu0 0.0
        %901 = vmatmul.mubr.f32.gmra.mxu0 %v673
        %v902 = vpop.f32.mrf.mxu0
        %v903 = vadd.f32 %v699, %v902
        %v904 = vpop.f32.mrf.mxu0
        %905 = vmatprep.mubr.f32.mxu0 0.0
        %906 = vmatmul.mubr.f32.gmra.mxu0 %v674
        %v907 = vpop.f32.mrf.mxu0
        %v908 = vadd.f32 %v699, %v907
        %v909 = vpop.f32.mrf.mxu0
        %910 = vmatprep.mubr.f32.mxu0 0.0
        %911 = vmatmul.mubr.f32.gmra.mxu0 %v675
        %v912 = vpop.f32.mrf.mxu0
        %v913 = vadd.f32 %v699, %v912
        %v914 = vpop.f32.mrf.mxu0
        %915 = vmatprep.mubr.f32.mxu0 0.0
        %916 = vmatmul.mubr.f32.gmra.mxu0 %v676
        %v917 = vpop.f32.mrf.mxu0
        %v918 = vadd.f32 %v699, %v917
        %v919 = vpop.f32.mrf.mxu0
        %920 = vmatprep.mubr.f32.mxu0 0.0
        %921 = vmatmul.mubr.f32.gmra.mxu0 %v677
        %v922 = vpop.f32.mrf.mxu0
        %v923 = vadd.f32 %v699, %v922
        %v924 = vpop.f32.mrf.mxu0
        %925 = vdwg.mxu0
        %v926 = vtanh.pop %v768
        %v927 = vtanh.pop %v773
        %v928 = vtanh.pop %v778
        %v929 = vtanh.pop %v783
        %v930 = vtanh.pop %v788
        %v931 = vtanh.pop %v793
        %v932 = vtanh.pop %v798
        %v933 = vtanh.pop %v803
        %v934 = vtanh.pop %v808
        %v935 = vtanh.pop %v813
        %v936 = vtanh.pop %v818
        %v937 = vtanh.pop %v823
        %v938 = vtanh.pop %v828
        %v939 = vtanh.pop %v833
        %v940 = vtanh.pop %v838
        %v941 = vtanh.pop %v843
        %v942 = vtanh.pop %v848
        %v943 = vtanh.pop %v853
        %v944 = vtanh.pop %v858
        %v945 = vtanh.pop %v863
        %v946 = vtanh.pop %v868
        %v947 = vtanh.pop %v873
        %v948 = vtanh.pop %v878
        %v949 = vtanh.pop %v883
        %v950 = vtanh.pop %v888
        %v951 = vtanh.pop %v893
        %v952 = vtanh.pop %v898
        %v953 = vtanh.pop %v903
        %v954 = vtanh.pop %v908
        %v955 = vtanh.pop %v913
        %v956 = vtanh.pop %v918
        %v957 = vtanh.pop %v923
        %v958 = vld [vmem:[%s5] sm:$0x1]
        %s959 = sld [smem:[#allocation2]]
        %v960 = vstv %s959
        %961 = vmatprep.subr.mxu0 0.0
        %962 = vmatpush1.xpose.msra.mxu0 %v941
        %963 = vmatprep.subr.mxu0 0.0
        %964 = vmatpush1.xpose.msra.mxu0 %v940
        %965 = vmatprep.subr.mxu0 0.0
        %966 = vmatpush1.xpose.msra.mxu0 %v939
        %967 = vmatprep.subr.mxu0 0.0
        %968 = vmatpush1.xpose.msra.mxu0 %v938
        %969 = vmatprep.subr.mxu0 0.0
        %970 = vmatpush1.xpose.msra.mxu0 %v937
        %971 = vmatprep.subr.mxu0 0.0
        %972 = vmatpush1.xpose.msra.mxu0 %v936
        %973 = vmatprep.subr.mxu0 0.0
        %974 = vmatpush1.xpose.msra.mxu0 %v935
        %975 = vmatprep.subr.mxu0 0.0
        %976 = vmatpush1.xpose.msra.mxu0 %v934
        %977 = vmatprep.subr.mxu0 0.0
        %978 = vmatpush1.xpose.msra.mxu0 %v933
        %979 = vmatprep.subr.mxu0 0.0
        %980 = vmatpush1.xpose.msra.mxu0 %v932
        %981 = vmatprep.subr.mxu0 0.0
        %982 = vmatpush1.xpose.msra.mxu0 %v931
        %983 = vmatprep.subr.mxu0 0.0
        %984 = vmatpush1.xpose.msra.mxu0 %v930
        %985 = vmatprep.subr.mxu0 0.0
        %986 = vmatpush1.xpose.msra.mxu0 %v929
        %987 = vmatprep.subr.mxu0 0.0
        %988 = vmatpush1.xpose.msra.mxu0 %v928
        %989 = vmatprep.subr.mxu0 0.0
        %990 = vmatpush1.xpose.msra.mxu0 %v927
        %991 = vmatprep.subr.mxu0 0.0
        %992 = vmatpush1.xpose.msra.mxu0 %v926
        %993 = vmatprep.subr.mxu0 0.0
        %994 = vmatpush2.xpose.msra.mxu0 %v957
        %995 = vmatprep.subr.mxu0 0.0
        %996 = vmatpush2.xpose.msra.mxu0 %v956
        %997 = vmatprep.subr.mxu0 0.0
        %998 = vmatpush2.xpose.msra.mxu0 %v955
        %999 = vmatprep.subr.mxu0 0.0
        %1000 = vmatpush2.xpose.msra.mxu0 %v954
        %1001 = vmatprep.subr.mxu0 0.0
        %1002 = vmatpush2.xpose.msra.mxu0 %v953
        %1003 = vmatprep.subr.mxu0 0.0
        %1004 = vmatpush2.xpose.msra.mxu0 %v952
        %1005 = vmatprep.subr.mxu0 0.0
        %1006 = vmatpush2.xpose.msra.mxu0 %v951
        %1007 = vmatprep.subr.mxu0 0.0
        %1008 = vmatpush2.xpose.msra.mxu0 %v950
        %1009 = vmatprep.subr.mxu0 0.0
        %1010 = vmatpush2.xpose.msra.mxu0 %v949
        %1011 = vmatprep.subr.mxu0 0.0
        %1012 = vmatpush2.xpose.msra.mxu0 %v948
        %1013 = vmatprep.subr.mxu0 0.0
        %1014 = vmatpush2.xpose.msra.mxu0 %v947
        %1015 = vmatprep.subr.mxu0 0.0
        %1016 = vmatpush2.xpose.msra.mxu0 %v946
        %1017 = vmatprep.subr.mxu0 0.0
        %1018 = vmatpush2.xpose.msra.mxu0 %v945
        %1019 = vmatprep.subr.mxu0 0.0
        %1020 = vmatpush2.xpose.msra.mxu0 %v944
        %1021 = vmatprep.subr.mxu0 0.0
        %1022 = vmatpush2.xpose.msra.mxu0 %v943
        %1023 = vmatprep.subr.mxu0 0.0
        %1024 = vmatpush2.xpose.msra.mxu0 %v942
        %1025 = vmatprep.mubr.f32.mxu0 0.0
        %1026 = vmatmul.mubr.f32.gmra.mxu0 %v958
        %v1027 = vpop.f32.mrf.mxu0
        %v1028 = vadd.f32 %v960, %v1027
        %v1029 = vpop.f32.mrf.mxu0
        %v1030 = vadd.f32 %v960, %v1029
        %1031 = vdwg.mxu0
        %v1034 = vcombine.low %v1028, %v1030
        %v1036 = vunpack.c.l.s4 1966171168
        %v1037 = vunpack.c.0.s8 %v1036
        %v1038 = vlaneseq
        %v1039 = vshrl.u32 %v1038, 7
        %v1040 = vsub.s32 %v1037, %v1039
        %v1041 = vrot.slane %v1034, %v1040
        %v1043 = vunpack.c.l.s4 1966171168
        %v1044 = vunpack.c.0.s8 %v1043
        %v1045 = vlaneseq
        %v1046 = vshrl.u32 %v1045, 7
        %v1047 = vsub.s32 %v1044, %v1046
        %v1048 = vrot.slane %v1041, %v1047
        %v1050 = vlaneseq
        %vm1051 = vcmp.ge.s32.totalorder %v1050, 0
        %vm1052 = vcmp.lt.s32.totalorder %v1050, 256
        %vm1053 = vmand %vm1051, %vm1052
        %1054 = vst.msk [vmem:[%s273] sm:$0x3] %vm1053, %v1048
        %s1055 = sand.u32 %s182, 1
        %s1056 = scalar_lea.sflag [#allocation4], %s1055
        %s1057 = sand.u32 %s182, 1
        %s1058 = smul.addr %s1057, 2
        %s1059 = scalar_lea.vmem [#allocation3], %s1058
        // Predicated region
        $region49: #{tpu_custom_call.1} parent=47 // pred_check
          %p1060 = pneg %p192
        $region50: #{tpu_custom_call.1} parent=47 // pred_check_branch
          %1062 = sbr.rel (%p1060) target = $region52
        $region51: #{tpu_custom_call.1} parent=47 // pred_region
          %s1063 = smul.u32 2, %s22
          %s1065 = ssub.s32 32, 32
          %1066 = vsyncadd %s1056, %s1065
          %s1067 = smul.addr %s1063, 16
          %s1068 = scalar_lea.hbm %s7, %s1067
          %s1070 = sshll.u32 %s1059, 4
          %s1071 = int_to_ptr.vmem [resolvable:$true] %s1070
          %1073 = dma.vmem_to_hbm [thread:$0]  %s1071, 32, %s1068, %s1056
        $region52: #{tpu_custom_call.1} parent=47 // pred_fallthru
          _
      $region48: #{tpu_custom_call.1} parent=5 // pred_fallthru
        _
      %p1074 = scmp.le.s32.totalorder 2, %s17
      // Predicated region
      $region53: #{tpu_custom_call.1} parent=5 // pred_check
        %p1075 = pneg %p1074
      $region54: #{tpu_custom_call.1} parent=5 // pred_check_branch
        %1077 = sbr.rel (%p1075) target = $region56
      $region55: #{tpu_custom_call.1} parent=5 // pred_region
        %s1078 = ssub.s32 %s17, 2
        // Predicated region
        $region57: #{tpu_custom_call.1} parent=55 // pred_check
          %p1079 = pneg %p198
        $region58: #{tpu_custom_call.1} parent=55 // pred_check_branch
          %1081 = sbr.rel (%p1079) target = $region60
        $region59: #{tpu_custom_call.1} parent=55 // pred_region
          %s1082 = sand.u32 %s183, 1
          %s1083 = scalar_lea.sflag [#allocation4], %s1082
          %s1084 = sand.u32 %s183, 1
          %s1085 = smul.addr %s1084, 2
          %s1086 = scalar_lea.vmem [#allocation3], %s1085
          %1087 = dma.done %s1083, 32
        $region60: #{tpu_custom_call.1} parent=55 // pred_fallthru
          _
      $region56: #{tpu_custom_call.1} parent=5 // pred_fallthru
        _
    $region6: #{tpu_custom_call.1} parent=1 // loop_footer
      %s21 = sadd.s32 1, %s17
    $region7: #{tpu_custom_call.1} parent=1 // loop_footer_branch
      %16 = sbr.rel target = $region3
    $region8: #{tpu_custom_call.1} parent=1 // loop_exit
      _
    %1088 = vsyncpa [#allocation4], 1
    %s1089 = scalar_lea.sflag [#allocation4], 1
    %1090 = vsyncpa %s1089, 1

</llo_original>
